<compile_context>
chip_gen: v7x
topology: tpu7x:2x2x1
jax: 0.10.0
libtpu: 0.0.40
codegen_flags: <defaults>
</compile_context>

<pallas_src>
import functools
import math

import jax
import jax.numpy as jnp
from jax.experimental import pallas as pl
from jax.experimental.pallas import tpu as pltpu


def _poisson_model_kernel(z_ref, rate_ref, coef_ref, notp_ref, eps_ref, exp_ref,
                          xhat_ref, zout_ref, *, K, L, inv_tau_int, inv_tau):
    """One [K, TILE_M] tile (states on sublanes, rows on lanes)."""
    z = z_ref[...]                                          # [K, Tm] f32

    # ---- PoissonForward ---------------------------------------------------
    # rate is already exp'd/sorted in the wrapper (grid-invariant).
    mu = jnp.sum(z * rate_ref[...], axis=0, keepdims=True)  # [1, Tm] == z @ rate
    sigma = jnp.sqrt(mu)
    xhat_ref[...] = eps_ref[...] * sigma + mu                # lane-dense store

    # ---- PoissonPrior -----------------------------------------------------
    # A = (1 - I)*notp + I*p  =>  z @ A = (p - notp)*z + notp*rowsum(z)
    # (no K x K matrix, no MXU).
    zsum = jnp.sum(z, axis=0, keepdims=True)                 # [1, Tm]
    zA = coef_ref[...] * z + notp_ref[...] * zsum            # [K, Tm]

    # target[l] = zA[l-1] within each length-L sequence; target at l%L==0 is 1/K.
    # Tiles start on L boundaries, so the dummy lane-0 column is always masked.
    shifted = jnp.concatenate([zA[:, :1], zA[:, :-1]], axis=1)
    lane = jax.lax.broadcasted_iota(jnp.int32, (1, zA.shape[1]), 1)
    target = jnp.where(lane % L == 0, jnp.float32(1.0 / K), shifted)

    # Gumbel-softmax via exponential race (mathematically identical):
    #   softmax((log target + gumbel)/tau) == (target/E)^(1/tau) / sum_k(...)
    e = jnp.maximum(exp_ref[...], jnp.float32(1e-20))        # Exp(1) noise, guarded
    ratio = target / e                                       # [K, Tm]
    r = ratio / jnp.max(ratio, axis=0, keepdims=True)        # (0, 1], column max = 1

    if inv_tau_int is not None:
        # integer 1/tau (e.g. tau=0.5 -> square): exponentiation by squaring, VPU only
        w, base, n = None, r, inv_tau_int
        while n:
            if n & 1:
                w = base if w is None else w * base
            n >>= 1
            if n:
                base = base * base
    else:
        # general tau: still only 2 transcendentals per element (was 4).
        w = jnp.exp(jnp.float32(inv_tau) *
                    jnp.log(jnp.maximum(r, jnp.float32(1e-30))))

    # Exact normalization so rows sum to 1 (denominator >= 1 by construction).
    zout_ref[...] = w / jnp.sum(w, axis=0, keepdims=True)    # lane-dense store


def _choose_tile_m(M, L, max_rows=32768):
    """Largest tile that divides M, is a multiple of lcm(L, 128) (shift
    correctness + lane alignment), capped so the double-buffered footprint
    (~208 B/row with the Exp(1) stream) fits the default scoped VMEM on all
    generations, and small enough that large M yields >= 2 grid steps so v7x
    can shard the 'parallel' axis across its two TensorCores."""
    base = (L * 128) // math.gcd(L, 128)          # lcm(L, 128)
    if M % base != 0 or M < 2 * base:
        # TODO(synk): for huge M with L not meshing with 128, tile on L
        # boundaries with a masked tail instead of one full-M block.
        return M
    cap = min(max_rows, M // 2)                   # guarantees >= 2 grid steps
    t = (cap // base) * base
    while t > 0 and M % t != 0:
        t -= base
    return t if t > 0 else M


def poisson_model_forward_km(z_km, rate, coef, notp, eps, expo, *, L, tau):
    """Core kernel on the lane-dense [K, M] layout (no transposes).
    z_km: [K, M]; rate: [K, 1]; coef/notp: [1, 1]; eps: [1, M]; expo: [K, M]."""
    K, M = z_km.shape
    inv_tau = 1.0 / float(tau)
    n = int(round(inv_tau))
    inv_tau_int = n if (abs(inv_tau - n) < 1e-9 and 1 <= n <= 16) else None

    tile_m = _choose_tile_m(M, L)
    grid = (M // tile_m,)

    kernel = functools.partial(_poisson_model_kernel, K=K, L=L,
                               inv_tau_int=inv_tau_int, inv_tau=inv_tau)

    xhat, zout = pl.pallas_call(
        kernel,
        out_shape=(
            jax.ShapeDtypeStruct((1, M), jnp.float32),
            jax.ShapeDtypeStruct((K, M), jnp.float32),
        ),
        grid=grid,
        in_specs=[
            pl.BlockSpec((K, tile_m), lambda i: (0, i)),   # z^T tile
            pl.BlockSpec((K, 1), lambda i: (0, 0)),        # rate column (resident)
            pl.BlockSpec((1, 1), lambda i: (0, 0)),        # p - notp
            pl.BlockSpec((1, 1), lambda i: (0, 0)),        # notp
            pl.BlockSpec((1, tile_m), lambda i: (0, i)),   # normal eps tile
            pl.BlockSpec((K, tile_m), lambda i: (0, i)),   # Exp(1) race-noise tile
        ],
        out_specs=(
            pl.BlockSpec((1, tile_m), lambda i: (0, i)),   # xhat^T tile
            pl.BlockSpec((K, tile_m), lambda i: (0, i)),   # z sample^T tile
        ),
        compiler_params=pltpu.CompilerParams(
            dimension_semantics=("parallel",)),            # v7x: shard over 2 TCs
    )(z_km, rate, coef, notp, eps, expo)
    return xhat, zout


def poisson_model_forward(zhat, log_rate, logits, *, tau, key):
    """Module-compatible wrapper. zhat: [B, L, K]. Returns (xhat [B, L], z [B, L, K])."""
    B, L, K = zhat.shape
    M = B * L

    # Lane-dense working layout (rows on lanes, states on sublanes).  NOTE: this
    # transpose and the output one each cost one extra HBM pass over the [K, M]
    # stream; callers able to work in [K, M] should use poisson_model_forward_km.
    z_km = zhat.reshape(M, K).astype(jnp.float32).T

    # Grid-invariant parameter prep, hoisted out of the kernel body.
    # torch.sort default dim=-1 on a [K, 1] tensor is a no-op; mirrored here.
    rate = jnp.sort(jnp.exp(log_rate.astype(jnp.float32).reshape(K, 1)), axis=-1)
    p = jax.nn.sigmoid(0.1 * logits.astype(jnp.float32).reshape(1, 1))
    notp = (1.0 - p) / jnp.float32(K - 1)
    coef = p - notp

    # Noise streams via jax.random (portable; the TPU hardware PRNG has no
    # lowering on the CPU/interpret fallback used by the harness).
    # TODO(synk): on a pure-TPU deployment, regenerate the [K, M] Exp(1) noise
    # in-kernel with pltpu.prng_random_bits to drop the largest input stream.
    k_eps, k_exp = jax.random.split(key)
    eps = jax.random.normal(k_eps, (1, M), jnp.float32)        # observation noise
    expo = jax.random.exponential(k_exp, (K, M), dtype=jnp.float32)

    xhat_km, z_km_out = poisson_model_forward_km(
        z_km, rate, coef, notp, eps, expo, L=L, tau=tau)

    return xhat_km.reshape(B, L), z_km_out.T.reshape(B, L, K)


if __name__ == "__main__":
    # hyperparameters of PoissonModel(K, tau, m, s, device)
    K = 8
    tau = 0.5
    m_init, s_init = 2.0, 0.0     # nn.init.uniform_(rate, s, m) -> U[s, m]
    B, L = 4, 32                  # M = B*L = 128 -> one full 128-lane tile

    root = jax.random.PRNGKey(0)
    k_rate, k_logit, k_z, k_noise = jax.random.split(root, 4)

    # deterministic parameter init (shapes from __init__)
    log_rate = jax.random.uniform(k_rate, (K, 1), jnp.float32,
                                  minval=s_init, maxval=m_init)
    logits = jax.random.normal(k_logit, (1,), jnp.float32)

    # example input: relaxed one-hot state posteriors (rows sum to 1)
    zhat = jax.nn.softmax(jax.random.normal(k_z, (B, L, K), jnp.float32), axis=-1)

    xhat, z = poisson_model_forward(zhat, log_rate, logits, tau=tau, key=k_noise)
    jax.block_until_ready((xhat, z))

    assert xhat.shape == (B, L)
    assert z.shape == (B, L, K)
    assert bool(jnp.all(jnp.isfinite(xhat)))
    assert bool(jnp.all(jnp.isfinite(z)))
    assert bool(jnp.allclose(jnp.sum(z, axis=-1), 1.0, atol=1e-4))
    print("KERNEL_OK")
</pallas_src>

<mosaic_0001>
module attributes {stable_mosaic.version = 11 : i64} {
  func.func @_poisson_model_kernel(%arg0: i32, %arg1: memref<8x128xf32, #tpu.memory_space<vmem>>, %arg2: memref<8x1xf32, #tpu.memory_space<vmem>>, %arg3: memref<1x1xf32, #tpu.memory_space<vmem>>, %arg4: memref<1x1xf32, #tpu.memory_space<vmem>>, %arg5: memref<1x128xf32, #tpu.memory_space<vmem>>, %arg6: memref<8x128xf32, #tpu.memory_space<vmem>>, %arg7: memref<1x128xf32, #tpu.memory_space<vmem>>, %arg8: memref<8x128xf32, #tpu.memory_space<vmem>>) attributes {dimension_semantics = [#tpu.dimension_semantics<parallel>], iteration_bounds = array<i64: 1>, scalar_prefetch = 0 : i64, scratch_operands = 0 : i64, tpu.core_type = #tpu.core_type<tc>, window_params = [{transform_indices = @transform_0, window_bounds = array<i64: 8, 128>}, {pipeline_mode = #tpu.pipeline_mode<synchronous>, transform_indices = @transform_1, window_bounds = array<i64: 8, 1>}, {pipeline_mode = #tpu.pipeline_mode<synchronous>, transform_indices = @transform_2, window_bounds = array<i64: 1, 1>}, {pipeline_mode = #tpu.pipeline_mode<synchronous>, transform_indices = @transform_3, window_bounds = array<i64: 1, 1>}, {transform_indices = @transform_4, window_bounds = array<i64: 1, 128>}, {transform_indices = @transform_5, window_bounds = array<i64: 8, 128>}, {transform_indices = @transform_6, window_bounds = array<i64: 1, 128>}, {transform_indices = @transform_7, window_bounds = array<i64: 8, 128>}]} {
    %c0 = arith.constant 0 : index
    %c0_0 = arith.constant 0 : index
    %0 = vector.load %arg1[%c0, %c0_0] : memref<8x128xf32, #tpu.memory_space<vmem>>, vector<8x128xf32>
    %c0_1 = arith.constant 0 : index
    %c0_2 = arith.constant 0 : index
    %1 = vector.load %arg2[%c0_1, %c0_2] : memref<8x1xf32, #tpu.memory_space<vmem>>, vector<8x1xf32>
    %2 = vector.broadcast %1 : vector<8x1xf32> to vector<8x128xf32>
    %3 = arith.mulf %0, %2 : vector<8x128xf32>
    %cst = arith.constant dense<0.000000e+00> : vector<128xf32>
    %4 = vector.multi_reduction <add>, %3, %cst [0] : vector<8x128xf32> to vector<128xf32>
    %5 = vector.shape_cast %4 : vector<128xf32> to vector<1x128xf32>
    %6 = math.sqrt %5 : vector<1x128xf32>
    %c0_3 = arith.constant 0 : index
    %c0_4 = arith.constant 0 : index
    %7 = vector.load %arg5[%c0_3, %c0_4] : memref<1x128xf32, #tpu.memory_space<vmem>>, vector<1x128xf32>
    %8 = arith.mulf %7, %6 : vector<1x128xf32>
    %9 = arith.addf %8, %5 : vector<1x128xf32>
    %c0_5 = arith.constant 0 : index
    %c0_6 = arith.constant 0 : index
    %10 = vector.load %arg7[%c0_5, %c0_6] : memref<1x128xf32, #tpu.memory_space<vmem>>, vector<1x128xf32>
    tpu.vector_store %arg7[%c0_5, %c0_6], %9 {strides = array<i32>} : memref<1x128xf32, #tpu.memory_space<vmem>>, vector<1x128xf32>,
    %cst_7 = arith.constant dense<0.000000e+00> : vector<128xf32>
    %11 = vector.multi_reduction <add>, %0, %cst_7 [0] : vector<8x128xf32> to vector<128xf32>
    %12 = vector.shape_cast %11 : vector<128xf32> to vector<1x128xf32>
    %c0_8 = arith.constant 0 : index
    %c0_9 = arith.constant 0 : index
    %13 = vector.load %arg3[%c0_8, %c0_9] : memref<1x1xf32, #tpu.memory_space<vmem>>, vector<1x1xf32>
    %14 = vector.broadcast %13 : vector<1x1xf32> to vector<8x128xf32>
    %15 = arith.mulf %14, %0 : vector<8x128xf32>
    %c0_10 = arith.constant 0 : index
    %c0_11 = arith.constant 0 : index
    %16 = vector.load %arg4[%c0_10, %c0_11] : memref<1x1xf32, #tpu.memory_space<vmem>>, vector<1x1xf32>
    %17 = vector.broadcast %16 : vector<1x1xf32> to vector<1x128xf32>
    %18 = arith.mulf %17, %12 : vector<1x128xf32>
    %19 = vector.broadcast %18 : vector<1x128xf32> to vector<8x128xf32>
    %20 = arith.addf %15, %19 : vector<8x128xf32>
    %21 = vector.extract_strided_slice %20 {offsets = [0, 0], sizes = [8, 1], strides = [1, 1]} : vector<8x128xf32> to vector<8x1xf32>
    %22 = vector.extract_strided_slice %20 {offsets = [0, 0], sizes = [8, 127], strides = [1, 1]} : vector<8x128xf32> to vector<8x127xf32>
    %23 = tpu.concatenate %21, %22 in 1 : vector<8x1xf32>, vector<8x127xf32> -> vector<8x128xf32>
    %24 = tpu.iota {dimensions = array<i32: 1>} : vector<1x128xi32>
    %c32_i32 = arith.constant 32 : i32
    %c0_i32 = arith.constant 0 : i32
    %25 = arith.cmpi eq, %c32_i32, %c0_i32 : i32
    %c1_i32 = arith.constant 1 : i32
    %26 = arith.select %25, %c1_i32, %c32_i32 : i32
    %27 = vector.broadcast %26 : i32 to vector<1x128xi32>
    %28 = arith.remsi %24, %27 : vector<1x128xi32>
    %c0_i32_12 = arith.constant 0 : i32
    %29 = vector.broadcast %c0_i32_12 : i32 to vector<1x128xi32>
    %30 = arith.cmpi ne, %28, %29 : vector<1x128xi32>
    %c0_i32_13 = arith.constant 0 : i32
    %31 = vector.broadcast %c0_i32_13 : i32 to vector<1x128xi32>
    %32 = arith.cmpi slt, %28, %31 : vector<1x128xi32>
    %c0_i32_14 = arith.constant 0 : i32
    %33 = arith.cmpi slt, %26, %c0_i32_14 : i32
    %34 = vector.broadcast %33 : i1 to vector<1x128xi1>
    %35 = vector.broadcast %34 : vector<1x128xi1> to vector<1x128xi1>
    %36 = arith.xori %32, %35 : vector<1x128xi1>
    %37 = arith.andi %36, %30 : vector<1x128xi1>
    %38 = vector.broadcast %26 : i32 to vector<1x128xi32>
    %39 = arith.addi %28, %38 : vector<1x128xi32>
    %40 = arith.select %37, %39, %28 : vector<1x128xi1>, vector<1x128xi32>
    %c0_i32_15 = arith.constant 0 : i32
    %41 = vector.broadcast %c0_i32_15 : i32 to vector<1x128xi32>
    %42 = arith.cmpi eq, %40, %41 : vector<1x128xi32>
    %cst_16 = arith.constant 1.250000e-01 : f32
    %43 = vector.shape_cast %42 : vector<1x128xi1> to vector<1x128xi1>
    %44 = vector.broadcast %43 : vector<1x128xi1> to vector<8x128xi1>
    %45 = vector.broadcast %cst_16 : f32 to vector<8x128xf32>
    %46 = arith.select %44, %45, %23 : vector<8x128xi1>, vector<8x128xf32>
    %c0_17 = arith.constant 0 : index
    %c0_18 = arith.constant 0 : index
    %47 = vector.load %arg6[%c0_17, %c0_18] : memref<8x128xf32, #tpu.memory_space<vmem>>, vector<8x128xf32>
    %cst_19 = arith.constant 9.99999968E-21 : f32
    %48 = vector.broadcast %cst_19 : f32 to vector<8x128xf32>
    %49 = arith.maximumf %47, %48 : vector<8x128xf32>
    %50 = arith.divf %46, %49 : vector<8x128xf32>
    %cst_20 = arith.constant dense<0xFF800000> : vector<128xf32>
    %51 = vector.multi_reduction <maximumf>, %50, %cst_20 [0] : vector<8x128xf32> to vector<128xf32>
    %52 = vector.shape_cast %51 : vector<128xf32> to vector<1x128xf32>
    %53 = vector.broadcast %52 : vector<1x128xf32> to vector<8x128xf32>
    %54 = arith.divf %50, %53 : vector<8x128xf32>
    %55 = arith.mulf %54, %54 : vector<8x128xf32>
    %cst_21 = arith.constant dense<0.000000e+00> : vector<128xf32>
    %56 = vector.multi_reduction <add>, %55, %cst_21 [0] : vector<8x128xf32> to vector<128xf32>
    %57 = vector.shape_cast %56 : vector<128xf32> to vector<1x128xf32>
    %58 = vector.broadcast %57 : vector<1x128xf32> to vector<8x128xf32>
    %59 = arith.divf %55, %58 : vector<8x128xf32>
    %c0_22 = arith.constant 0 : index
    %c0_23 = arith.constant 0 : index
    %60 = vector.load %arg8[%c0_22, %c0_23] : memref<8x128xf32, #tpu.memory_space<vmem>>, vector<8x128xf32>
    tpu.vector_store %arg8[%c0_22, %c0_23], %59 {strides = array<i32>} : memref<8x128xf32, #tpu.memory_space<vmem>>, vector<8x128xf32>,
    return
  }
  func.func @transform_0(%arg0: i32) -> (i32, i32) {
    %c0_i32 = arith.constant 0 : i32
    %c0_i32_0 = arith.constant 0 : i32
    return %c0_i32, %arg0 : i32, i32
  }
  func.func @transform_1(%arg0: i32) -> (i32, i32) {
    %c0_i32 = arith.constant 0 : i32
    %c0_i32_0 = arith.constant 0 : i32
    %c0_i32_1 = arith.constant 0 : i32
    return %c0_i32, %c0_i32_0 : i32, i32
  }
  func.func @transform_2(%arg0: i32) -> (i32, i32) {
    %c0_i32 = arith.constant 0 : i32
    %c0_i32_0 = arith.constant 0 : i32
    %c0_i32_1 = arith.constant 0 : i32
    return %c0_i32, %c0_i32_0 : i32, i32
  }
  func.func @transform_3(%arg0: i32) -> (i32, i32) {
    %c0_i32 = arith.constant 0 : i32
    %c0_i32_0 = arith.constant 0 : i32
    %c0_i32_1 = arith.constant 0 : i32
    return %c0_i32, %c0_i32_0 : i32, i32
  }
  func.func @transform_4(%arg0: i32) -> (i32, i32) {
    %c0_i32 = arith.constant 0 : i32
    %c0_i32_0 = arith.constant 0 : i32
    return %c0_i32, %arg0 : i32, i32
  }
  func.func @transform_5(%arg0: i32) -> (i32, i32) {
    %c0_i32 = arith.constant 0 : i32
    %c0_i32_0 = arith.constant 0 : i32
    return %c0_i32, %arg0 : i32, i32
  }
  func.func @transform_6(%arg0: i32) -> (i32, i32) {
    %c0_i32 = arith.constant 0 : i32
    %c0_i32_0 = arith.constant 0 : i32
    return %c0_i32, %arg0 : i32, i32
  }
  func.func @transform_7(%arg0: i32) -> (i32, i32) {
    %c0_i32 = arith.constant 0 : i32
    %c0_i32_0 = arith.constant 0 : i32
    return %c0_i32, %arg0 : i32, i32
  }
}

</mosaic_0001>

<llo_original>
// kernel: tpu_custom_call.1
$region0: #{tpu_custom_call.1}
  #allocation0 [shape = 'u32[]', space=smem, size = 0x4, offset = 0x4, fixed_abs, tag = 'smem constant byte address 0x4 - core index']
  #allocation1 [shape = 'u32[144,128]{1,0:T(1,128)}', space=vmem, size = 0x12000, scoped, tag = 'internal scratch']
  #allocation2 [shape = 'f32[1,1]{1,0:T(1,128)S(1)}', space=vmem, size = 0x200, scoped, tag = 'scoped memory for tpu_custom_call.1']
  #allocation3 [shape = 'f32[1,1]{1,0:T(1,128)S(1)}', space=vmem, size = 0x200, scoped, tag = 'scoped memory for tpu_custom_call.1']
  %s0 = inlined_call_operand.vmem [shape: f32[8,128], index: 0, kind: input, shape index: {}]
  %s1 = inlined_call_operand.vmem [shape: f32[8,1], index: 1, kind: input, shape index: {}]
  %s2 = inlined_call_operand.<no memory space> [shape: f32[1,1], index: 2, kind: input, shape index: {}]
  %s3 = inlined_call_operand.<no memory space> [shape: f32[1,1], index: 3, kind: input, shape index: {}]
  %s4 = inlined_call_operand.vmem [shape: f32[1,128], index: 4, kind: input, shape index: {}]
  %s5 = inlined_call_operand.vmem [shape: f32[8,128], index: 5, kind: input, shape index: {}]
  %s6 = inlined_call_operand.hbm [shape: f32[1,128], index: 6, kind: output, shape index: {0}]
  %s7 = inlined_call_operand.hbm [shape: f32[8,128], index: 7, kind: output, shape index: {1}]
  %8 = xla_tuple %s6, %s7
  %s9 = sld [smem:[#allocation0]]
  $region42: #{tpu_custom_call.1} parent=0
    _
  %s11 = ssub.s32 1, %s9
  %s12 = scalar_select 0, %s11, %s9
  %v13 = vstv %s2
  %14 = vst [vmem:[#allocation2] sm:$0x1] %v13
  %v15 = vstv %s3
  %16 = vst [vmem:[#allocation3] sm:$0x1] %v15
  $region1: #{tpu_custom_call.1} parent=0
    #allocation4 [shape = 'u8[512]{0}', space=vmem, size = 0x400, scoped, tag = 'output window, operand 0, single buffered']
    #allocation5 [shape = 's32[1]{0}', space=sflag, size = 0x4, scoped, tag = 'scoped memory for tpu_custom_call.1']
    #allocation6 [shape = 'u8[4096]{0}', space=vmem, size = 0x1000, scoped, tag = 'output window, operand 1, single buffered']
    #allocation7 [shape = 's32[1]{0}', space=sflag, size = 0x4, scoped, tag = 'scoped memory for tpu_custom_call.1']
    %17 = vsyncpa [#allocation5], 0
    %18 = vsyncpa [#allocation7], 0
    // Predicated region
    $region2: #{tpu_custom_call.1} parent=1 // pred_check
      _
    $region3: #{tpu_custom_call.1} parent=1 // pred_check_branch
      %20 = sbr.rel (0) target = $region5
    $region4: #{tpu_custom_call.1} parent=1 // pred_region
      _
    $region5: #{tpu_custom_call.1} parent=1 // pred_fallthru
      _
    // Predicated region
    $region6: #{tpu_custom_call.1} parent=1 // pred_check
      _
    $region7: #{tpu_custom_call.1} parent=1 // pred_check_branch
      %22 = sbr.rel (0) target = $region9
    $region8: #{tpu_custom_call.1} parent=1 // pred_region
      _
    $region9: #{tpu_custom_call.1} parent=1 // pred_fallthru
      _
    // Predicated region
    $region10: #{tpu_custom_call.1} parent=1 // pred_check
      _
    $region11: #{tpu_custom_call.1} parent=1 // pred_check_branch
      %24 = sbr.rel (0) target = $region13
    $region12: #{tpu_custom_call.1} parent=1 // pred_region
      _
    $region13: #{tpu_custom_call.1} parent=1 // pred_fallthru
      _
    // Predicated region
    $region14: #{tpu_custom_call.1} parent=1 // pred_check
      _
    $region15: #{tpu_custom_call.1} parent=1 // pred_check_branch
      %26 = sbr.rel (0) target = $region17
    $region16: #{tpu_custom_call.1} parent=1 // pred_region
      _
    $region17: #{tpu_custom_call.1} parent=1 // pred_fallthru
      _
    // Predicated region
    $region18: #{tpu_custom_call.1} parent=1 // pred_check
      _
    $region19: #{tpu_custom_call.1} parent=1 // pred_check_branch
      %28 = sbr.rel (0) target = $region21
    $region20: #{tpu_custom_call.1} parent=1 // pred_region
      _
    $region21: #{tpu_custom_call.1} parent=1 // pred_fallthru
      _
    // Predicated region
    $region22: #{tpu_custom_call.1} parent=1 // pred_check
      _
    $region23: #{tpu_custom_call.1} parent=1 // pred_check_branch
      %30 = sbr.rel (0) target = $region25
    $region24: #{tpu_custom_call.1} parent=1 // pred_region
      _
    $region25: #{tpu_custom_call.1} parent=1 // pred_fallthru
      _
    %v31 = vld [vmem:[%s0] sm:$0xff]
    %v32 = vld [vmem:[%s1] sm:$0xff]
    %34 = vset.pattern.permute.xlu0 0
    %35 = vperm.xlu0 %34, %v32
    %v36 = vpop.permute.xlu0 %35
    %v38 = vmul.f32 %v31, %v36
    %v39 = vrot.slane %v38, 4
    %v40 = vadd.f32 %v38, %v39
    %v41 = vrot.slane %v40, 2
    %v42 = vadd.f32 %v40, %v41
    %v43 = vrot.slane %v42, 1
    %v44 = vadd.f32 %v42, %v43
    %v45 = vrsqrt.pop %v44
    %v46 = vmul.f32 %v44, %v45
    %vm47 = vcmp.eq.f32.partialorder %v44, inf
    %v48 = vsel %vm47, %v44, %v46
    %vm49 = vcmp.eq.f32.partialorder %v44, 0.0
    %v50 = vand.u32 %v44, 2147483648
    %v51 = vsel %vm49, %v50, %v48
    %v52 = vld [vmem:[%s4] sm:$0x1]
    %v53 = vmul.f32 %v52, %v51
    %v54 = vadd.f32 %v53, %v44
    %55 = vst [vmem:[#allocation4] sm:$0x1] %v54
    %v56 = vrot.slane %v31, 4
    %v57 = vadd.f32 %v31, %v56
    %v58 = vrot.slane %v57, 2
    %v59 = vadd.f32 %v57, %v58
    %v60 = vrot.slane %v59, 1
    %v61 = vadd.f32 %v59, %v60
    %v62 = vld [vmem:[#allocation2] sm:$0x1]
    %v64 = vlaneseq
    %v65 = vshrl.u32 %v64, 7
    %v66 = vsub.s32 0, %v65
    %v67 = vrot.slane %v62, %v66
    %68 = vset.pattern.permute.xlu0 0
    %69 = vperm.xlu0 %68, %v67
    %v70 = vpop.permute.xlu0 %69
    %v72 = vmul.f32 %v70, %v31
    %v73 = vld [vmem:[#allocation3] sm:$0x1]
    %75 = vset.pattern.permute.xlu0 0
    %76 = vperm.xlu0 %75, %v73
    %v77 = vpop.permute.xlu0 %76
    %v79 = vlaneseq
    %v80 = vshrl.u32 %v79, 7
    %v81 = vsub.s32 0, %v80
    %v82 = vrot.slane %v77, %v81
    %v83 = vmul.f32 %v82, %v61
    %v84 = vadd.f32 %v72, %v83
    %86 = vrot.lane.b32.xlu0 %v84, 1
    %v87 = vpop.permute.xlu0 %86
    %vm89 = vcmask 7168
    %v90 = vsel %vm89, %v84, %v87
    %v91 = vlaneseq
    %v92 = vand.u32 %v91, 127
    %vm93 = vcmp.lt.s32.totalorder %v92, 0
    %v94 = vsub.s32 0, %v92
    %v95 = vsel %vm93, %v94, %v92
    %v96 = vshrl.u32 %v95, 5
    %v97 = vand.u32 %v95, 31
    %v98 = vsub.s32 0, %v97
    %v99 = vsel %vm93, %v98, %v97
    %vm100 = vcmp.ne.s32.totalorder %v99, 0
    %vm101 = vcmp.lt.s32.totalorder %v99, 0
    %vm102 = vmand %vm101, %vm100
    %v103 = vadd.s32 %v99, 32
    %v104 = vsel %vm102, %v103, %v99
    %vm105 = vcmp.eq.s32.totalorder %v104, 0
    %v106 = vsel %vm105, 1, 0
    %vm107 = vcmp.eq.s32.totalorder %v106, 1
    %v108 = vsel %vm107, 0.125, %v90
    %v109 = vld [vmem:[%s5] sm:$0xff]
    %v110 = vmax.f32 %v109, 1e-20
    %v111 = vrcp.pop %v110
    %v112 = vmul.f32 %v108, %v111
    %v113 = vrot.slane %v112, 4
    %v114 = vmax.f32 %v112, %v113
    %v115 = vrot.slane %v114, 2
    %v116 = vmax.f32 %v114, %v115
    %v117 = vrot.slane %v116, 1
    %v118 = vmax.f32 %v116, %v117
    %v119 = vrcp.pop %v118
    %v120 = vmul.f32 %v112, %v119
    %v121 = vmul.f32 %v120, %v120
    %v122 = vrot.slane %v121, 4
    %v123 = vadd.f32 %v121, %v122
    %v124 = vrot.slane %v123, 2
    %v125 = vadd.f32 %v123, %v124
    %v126 = vrot.slane %v125, 1
    %v127 = vadd.f32 %v125, %v126
    %v128 = vrcp.pop %v127
    %v129 = vmul.f32 %v121, %v128
    %130 = vst [vmem:[#allocation6] sm:$0xff] %v129
    // Predicated region
    $region26: #{tpu_custom_call.1} parent=1 // pred_check
      _
    $region27: #{tpu_custom_call.1} parent=1 // pred_check_branch
      %132 = sbr.rel (0) target = $region29
    $region28: #{tpu_custom_call.1} parent=1 // pred_region
      %s134 = ssub.s32 16, 16
      %135 = vsyncadd [#allocation5], %s134
      %s137 = sshll.u32 [#allocation4], 4
      %s138 = int_to_ptr.vmem [resolvable:$true] %s137
      %140 = dma.vmem_to_hbm [thread:$0]  %s138, 16, %s6, [#allocation5]
    $region29: #{tpu_custom_call.1} parent=1 // pred_fallthru
      _
    // Predicated region
    $region30: #{tpu_custom_call.1} parent=1 // pred_check
      _
    $region31: #{tpu_custom_call.1} parent=1 // pred_check_branch
      %142 = sbr.rel (0) target = $region33
    $region32: #{tpu_custom_call.1} parent=1 // pred_region
      %s144 = ssub.s32 128, 128
      %145 = vsyncadd [#allocation7], %s144
      %s147 = sshll.u32 [#allocation6], 4
      %s148 = int_to_ptr.vmem [resolvable:$true] %s147
      %150 = dma.vmem_to_hbm [thread:$0]  %s148, 128, %s7, [#allocation7]
    $region33: #{tpu_custom_call.1} parent=1 // pred_fallthru
      _
    // Predicated region
    $region34: #{tpu_custom_call.1} parent=1 // pred_check
      _
    $region35: #{tpu_custom_call.1} parent=1 // pred_check_branch
      %152 = sbr.rel (0) target = $region37
    $region36: #{tpu_custom_call.1} parent=1 // pred_region
      %153 = dma.done [#allocation5], 16
    $region37: #{tpu_custom_call.1} parent=1 // pred_fallthru
      _
    // Predicated region
    $region38: #{tpu_custom_call.1} parent=1 // pred_check
      _
    $region39: #{tpu_custom_call.1} parent=1 // pred_check_branch
      %155 = sbr.rel (0) target = $region41
    $region40: #{tpu_custom_call.1} parent=1 // pred_region
      %156 = dma.done [#allocation7], 128
    $region41: #{tpu_custom_call.1} parent=1 // pred_fallthru
      _
    %157 = vsyncpa [#allocation5], 1
    %158 = vsyncpa [#allocation7], 1

</llo_original>
